<compile_context>
chip_gen: v7x
topology: tpu7x:2x2x1
jax: 0.10.0
libtpu: 0.0.40
codegen_flags: <defaults>
</compile_context>

<pallas_src>
import jax
import jax.numpy as jnp
from jax.experimental import pallas as pl
from jax.experimental.pallas import tpu as pltpu


def _round_up(x: int, m: int) -> int:
    return ((x + m - 1) // m) * m


def _mlp_kernel(xT_ref, w1_ref, b1_ref, w2_ref, b2_ref, oT_ref):
    # xT_ref: (input_size, TN)  bf16  -- particles on the 128-lane axis
    # w1_ref: (hidden, input)   bf16     b1_ref: (hidden, 1) f32
    # w2_ref: (output, hidden)  bf16     b2_ref: (output, 1) f32
    # oT_ref: (output, TN)      f32   -- lane-dense output tile
    h = jnp.dot(w1_ref[...], xT_ref[...], preferred_element_type=jnp.float32)
    h = jnp.maximum(h + b1_ref[...], 0.0)                       # bias + ReLU in f32
    y = jnp.dot(w2_ref[...], h.astype(w2_ref.dtype),
                preferred_element_type=jnp.float32)
    y = jnp.maximum(y + b2_ref[...], 0.0)                       # bias + ReLU in f32
    oT_ref[...] = y.astype(oT_ref.dtype)


def particle_encoder_forward(x, w1, b1, w2, b2, *, block_cols=None,
                             compute_dtype=jnp.bfloat16):
    """ParticleEncoder forward.

    x:  [N, input_size]
    w1: [hidden_size, input_size]   b1: [hidden_size]   (torch nn.Linear layout)
    w2: [output_size, hidden_size]  b2: [output_size]
    returns [N, output_size] float32
    """
    n, input_size = x.shape
    hidden_size, _ = w1.shape
    output_size, _ = w2.shape

    # Lane-dense blocking over the particle axis (multiple of 128). Default to
    # ~512 columns so larger particle counts get a multi-step pipelined grid.
    if block_cols is None:
        block_cols = min(512, _round_up(n, 128))
    block_cols = _round_up(block_cols, 128)
    n_pad = _round_up(n, block_cols)
    grid = (n_pad // block_cols,)

    # Transpose so particles sit on the lane axis; pad ragged N with zeros.
    xT = jnp.asarray(x, compute_dtype).T                        # [input, N]
    if n_pad != n:
        xT = jnp.pad(xT, ((0, 0), (0, n_pad - n)))
    w1c = jnp.asarray(w1, compute_dtype)                        # [hidden, input]
    w2c = jnp.asarray(w2, compute_dtype)                        # [output, hidden]
    b1c = jnp.asarray(b1, jnp.float32).reshape(hidden_size, 1)  # [hidden, 1]
    b2c = jnp.asarray(b2, jnp.float32).reshape(output_size, 1)  # [output, 1]

    oT = pl.pallas_call(
        _mlp_kernel,
        out_shape=jax.ShapeDtypeStruct((output_size, n_pad), jnp.float32),
        grid_spec=pl.GridSpec(
            grid=grid,
            in_specs=[
                # x^T blocked over the particle (lane) axis.
                pl.BlockSpec((input_size, block_cols), lambda i: (0, i)),
                # Weights / biases: constant index_map -> stay VMEM-resident.
                pl.BlockSpec((hidden_size, input_size), lambda i: (0, 0)),
                pl.BlockSpec((hidden_size, 1), lambda i: (0, 0)),
                pl.BlockSpec((output_size, hidden_size), lambda i: (0, 0)),
                pl.BlockSpec((output_size, 1), lambda i: (0, 0)),
            ],
            out_specs=pl.BlockSpec((output_size, block_cols), lambda i: (0, i)),
        ),
        compiler_params=pltpu.CompilerParams(
            dimension_semantics=("parallel",),      # independent grid steps (megacore)
            vmem_limit_bytes=32 * 1024 * 1024,      # well under v7x's 64 MiB VMEM
        ),
    )(xT, w1c, b1c, w2c, b2c)

    return oT[:, :n].T                              # [N, output_size]


def _reference(x, w1, b1, w2, b2):
    h = jnp.maximum(x @ w1.T + b1, 0.0)
    return jnp.maximum(h @ w2.T + b2, 0.0)


if __name__ == "__main__":
    # Small shapes consistent with the module: [n_particles, input_size] MLP.
    n_particles = 32
    input_size = 16
    hidden_size = 32
    output_size = 16

    key = jax.random.PRNGKey(0)
    kx, kw1, kb1, kw2, kb2 = jax.random.split(key, 5)

    x = jax.random.normal(kx, (n_particles, input_size), dtype=jnp.float32)
    # Deterministic synthetic parameters (torch.nn.Linear shapes: [out, in]).
    w1 = jax.random.normal(kw1, (hidden_size, input_size), dtype=jnp.float32) * 0.1
    b1 = jax.random.normal(kb1, (hidden_size,), dtype=jnp.float32) * 0.1
    w2 = jax.random.normal(kw2, (output_size, hidden_size), dtype=jnp.float32) * 0.1
    b2 = jax.random.normal(kb2, (output_size,), dtype=jnp.float32) * 0.1

    out = jax.block_until_ready(particle_encoder_forward(x, w1, b1, w2, b2))
    ref = _reference(x, w1, b1, w2, b2)
    assert out.shape == (n_particles, output_size)
    # bf16 MXU operands with f32 accumulation -> loosened tolerance vs f32 ref.
    assert jnp.allclose(out, ref, atol=2e-2, rtol=2e-2), "mismatch vs reference"

    # Ragged N + explicit multi-step grid (exercises padding + pipelined blocks).
    n2 = 300
    x2 = jax.random.normal(jax.random.PRNGKey(1), (n2, input_size), dtype=jnp.float32)
    out2 = jax.block_until_ready(
        particle_encoder_forward(x2, w1, b1, w2, b2, block_cols=128))
    ref2 = _reference(x2, w1, b1, w2, b2)
    assert out2.shape == (n2, output_size)
    assert jnp.allclose(out2, ref2, atol=2e-2, rtol=2e-2), "mismatch vs reference (ragged)"

    print("KERNEL_OK")
</pallas_src>

<mosaic_0001>
module attributes {stable_mosaic.version = 11 : i64} {
  func.func @_mlp_kernel(%arg0: i32, %arg1: memref<16x128xbf16, #tpu.memory_space<vmem>>, %arg2: memref<32x16xbf16, #tpu.memory_space<vmem>>, %arg3: memref<32x1xf32, #tpu.memory_space<vmem>>, %arg4: memref<16x32xbf16, #tpu.memory_space<vmem>>, %arg5: memref<16x1xf32, #tpu.memory_space<vmem>>, %arg6: memref<16x128xf32, #tpu.memory_space<vmem>>) attributes {dimension_semantics = [#tpu.dimension_semantics<parallel>], iteration_bounds = array<i64: 1>, scalar_prefetch = 0 : i64, scratch_operands = 0 : i64, tpu.core_type = #tpu.core_type<tc>, window_params = [{transform_indices = @transform_0, window_bounds = array<i64: 16, 128>}, {pipeline_mode = #tpu.pipeline_mode<synchronous>, transform_indices = @transform_1, window_bounds = array<i64: 32, 16>}, {pipeline_mode = #tpu.pipeline_mode<synchronous>, transform_indices = @transform_2, window_bounds = array<i64: 32, 1>}, {pipeline_mode = #tpu.pipeline_mode<synchronous>, transform_indices = @transform_3, window_bounds = array<i64: 16, 32>}, {pipeline_mode = #tpu.pipeline_mode<synchronous>, transform_indices = @transform_4, window_bounds = array<i64: 16, 1>}, {transform_indices = @transform_5, window_bounds = array<i64: 16, 128>}]} {
    %c0 = arith.constant 0 : index
    %c0_0 = arith.constant 0 : index
    %0 = vector.load %arg2[%c0, %c0_0] : memref<32x16xbf16, #tpu.memory_space<vmem>>, vector<32x16xbf16>
    %c0_1 = arith.constant 0 : index
    %c0_2 = arith.constant 0 : index
    %1 = vector.load %arg1[%c0_1, %c0_2] : memref<16x128xbf16, #tpu.memory_space<vmem>>, vector<16x128xbf16>
    %cst = arith.constant dense<0.000000e+00> : vector<32x128xf32>
    %2 = tpu.matmul %0, %1, %cst {dimension_numbers = #tpu.dot_dimension_numbers<[1], [0], [0], [1], [0, 0, 1, 1], [], []>} : vector<32x16xbf16>, vector<16x128xbf16>, vector<32x128xf32> -> vector<32x128xf32>
    %c0_3 = arith.constant 0 : index
    %c0_4 = arith.constant 0 : index
    %3 = vector.load %arg3[%c0_3, %c0_4] : memref<32x1xf32, #tpu.memory_space<vmem>>, vector<32x1xf32>
    %4 = vector.broadcast %3 : vector<32x1xf32> to vector<32x128xf32>
    %5 = arith.addf %2, %4 : vector<32x128xf32>
    %cst_5 = arith.constant 0.000000e+00 : f32
    %6 = vector.broadcast %cst_5 : f32 to vector<32x128xf32>
    %7 = arith.maximumf %5, %6 : vector<32x128xf32>
    %c0_6 = arith.constant 0 : index
    %c0_7 = arith.constant 0 : index
    %8 = vector.load %arg4[%c0_6, %c0_7] : memref<16x32xbf16, #tpu.memory_space<vmem>>, vector<16x32xbf16>
    %9 = arith.truncf %7 : vector<32x128xf32> to vector<32x128xbf16>
    %cst_8 = arith.constant dense<0.000000e+00> : vector<16x128xf32>
    %10 = tpu.matmul %8, %9, %cst_8 {dimension_numbers = #tpu.dot_dimension_numbers<[1], [0], [0], [1], [0, 0, 1, 1], [], []>} : vector<16x32xbf16>, vector<32x128xbf16>, vector<16x128xf32> -> vector<16x128xf32>
    %c0_9 = arith.constant 0 : index
    %c0_10 = arith.constant 0 : index
    %11 = vector.load %arg5[%c0_9, %c0_10] : memref<16x1xf32, #tpu.memory_space<vmem>>, vector<16x1xf32>
    %12 = vector.broadcast %11 : vector<16x1xf32> to vector<16x128xf32>
    %13 = arith.addf %10, %12 : vector<16x128xf32>
    %cst_11 = arith.constant 0.000000e+00 : f32
    %14 = vector.broadcast %cst_11 : f32 to vector<16x128xf32>
    %15 = arith.maximumf %13, %14 : vector<16x128xf32>
    %c0_12 = arith.constant 0 : index
    %c0_13 = arith.constant 0 : index
    %16 = vector.load %arg6[%c0_12, %c0_13] : memref<16x128xf32, #tpu.memory_space<vmem>>, vector<16x128xf32>
    tpu.vector_store %arg6[%c0_12, %c0_13], %15 {strides = array<i32>} : memref<16x128xf32, #tpu.memory_space<vmem>>, vector<16x128xf32>,
    return
  }
  func.func @transform_0(%arg0: i32) -> (i32, i32) {
    %c0_i32 = arith.constant 0 : i32
    %c0_i32_0 = arith.constant 0 : i32
    return %c0_i32, %arg0 : i32, i32
  }
  func.func @transform_1(%arg0: i32) -> (i32, i32) {
    %c0_i32 = arith.constant 0 : i32
    %c0_i32_0 = arith.constant 0 : i32
    %c0_i32_1 = arith.constant 0 : i32
    return %c0_i32, %c0_i32_0 : i32, i32
  }
  func.func @transform_2(%arg0: i32) -> (i32, i32) {
    %c0_i32 = arith.constant 0 : i32
    %c0_i32_0 = arith.constant 0 : i32
    %c0_i32_1 = arith.constant 0 : i32
    return %c0_i32, %c0_i32_0 : i32, i32
  }
  func.func @transform_3(%arg0: i32) -> (i32, i32) {
    %c0_i32 = arith.constant 0 : i32
    %c0_i32_0 = arith.constant 0 : i32
    %c0_i32_1 = arith.constant 0 : i32
    return %c0_i32, %c0_i32_0 : i32, i32
  }
  func.func @transform_4(%arg0: i32) -> (i32, i32) {
    %c0_i32 = arith.constant 0 : i32
    %c0_i32_0 = arith.constant 0 : i32
    %c0_i32_1 = arith.constant 0 : i32
    return %c0_i32, %c0_i32_0 : i32, i32
  }
  func.func @transform_5(%arg0: i32) -> (i32, i32) {
    %c0_i32 = arith.constant 0 : i32
    %c0_i32_0 = arith.constant 0 : i32
    return %c0_i32, %arg0 : i32, i32
  }
}

</mosaic_0001>

<llo_original>
// kernel: tpu_custom_call.1
$region0: #{tpu_custom_call.1}
  #allocation0 [shape = 'u32[]', space=smem, size = 0x4, offset = 0x4, fixed_abs, tag = 'smem constant byte address 0x4 - core index']
  #allocation1 [shape = 'u32[144,128]{1,0:T(1,128)}', space=vmem, size = 0x12000, scoped, tag = 'internal scratch']
  %s0 = inlined_call_operand.vmem [shape: bf16[16,128], index: 0, kind: input, shape index: {}]
  %s1 = inlined_call_operand.vmem [shape: bf16[32,16], index: 1, kind: input, shape index: {}]
  %s2 = inlined_call_operand.vmem [shape: f32[32,1], index: 2, kind: input, shape index: {}]
  %s3 = inlined_call_operand.vmem [shape: bf16[16,32], index: 3, kind: input, shape index: {}]
  %s4 = inlined_call_operand.vmem [shape: f32[16,1], index: 4, kind: input, shape index: {}]
  %s5 = inlined_call_operand.hbm [shape: f32[16,128], index: 5, kind: output, shape index: {}]
  %s6 = sld [smem:[#allocation0]]
  $region30: #{tpu_custom_call.1} parent=0
    _
  %s8 = ssub.s32 1, %s6
  %s9 = scalar_select 0, %s8, %s6
  $region1: #{tpu_custom_call.1} parent=0
    #allocation2 [shape = 'u8[8192]{0}', space=vmem, size = 0x2000, scoped, tag = 'output window, operand 0, single buffered']
    #allocation3 [shape = 's32[1]{0}', space=sflag, size = 0x4, scoped, tag = 'scoped memory for tpu_custom_call.1']
    %10 = vsyncpa [#allocation3], 0
    // Predicated region
    $region2: #{tpu_custom_call.1} parent=1 // pred_check
      _
    $region3: #{tpu_custom_call.1} parent=1 // pred_check_branch
      %12 = sbr.rel (0) target = $region5
    $region4: #{tpu_custom_call.1} parent=1 // pred_region
      _
    $region5: #{tpu_custom_call.1} parent=1 // pred_fallthru
      _
    // Predicated region
    $region6: #{tpu_custom_call.1} parent=1 // pred_check
      _
    $region7: #{tpu_custom_call.1} parent=1 // pred_check_branch
      %14 = sbr.rel (0) target = $region9
    $region8: #{tpu_custom_call.1} parent=1 // pred_region
      _
    $region9: #{tpu_custom_call.1} parent=1 // pred_fallthru
      _
    // Predicated region
    $region10: #{tpu_custom_call.1} parent=1 // pred_check
      _
    $region11: #{tpu_custom_call.1} parent=1 // pred_check_branch
      %16 = sbr.rel (0) target = $region13
    $region12: #{tpu_custom_call.1} parent=1 // pred_region
      _
    $region13: #{tpu_custom_call.1} parent=1 // pred_fallthru
      _
    // Predicated region
    $region14: #{tpu_custom_call.1} parent=1 // pred_check
      _
    $region15: #{tpu_custom_call.1} parent=1 // pred_check_branch
      %18 = sbr.rel (0) target = $region17
    $region16: #{tpu_custom_call.1} parent=1 // pred_region
      _
    $region17: #{tpu_custom_call.1} parent=1 // pred_fallthru
      _
    // Predicated region
    $region18: #{tpu_custom_call.1} parent=1 // pred_check
      _
    $region19: #{tpu_custom_call.1} parent=1 // pred_check_branch
      %20 = sbr.rel (0) target = $region21
    $region20: #{tpu_custom_call.1} parent=1 // pred_region
      _
    $region21: #{tpu_custom_call.1} parent=1 // pred_fallthru
      _
    %v22 = vld [vmem:[%s1] sm:$0xf]
    %v23 = vld [vmem:[%s1 + $0x4] sm:$0xf]
    %v24 = vld [vmem:[%s1 + $0x8] sm:$0xf]
    %v25 = vld [vmem:[%s1 + $0xc] sm:$0xf]
    %v26 = vld [vmem:[%s0] sm:$0xf]
    %v27 = vld [vmem:[%s0 + $0x4] sm:$0xf]
    %v28 = vld [vmem:[%s2] sm:$0xff]
    %v29 = vld [vmem:[%s2 + $0x8] sm:$0xff]
    %v30 = vld [vmem:[%s2 + $0x10] sm:$0xff]
    %v31 = vld [vmem:[%s2 + $0x18] sm:$0xff]
    %33 = vset.pattern.permute.xlu0 0
    %34 = vperm.xlu0 %33, %v28
    %v35 = vpop.permute.xlu0 %34
    %38 = vset.pattern.permute.xlu0 0
    %39 = vperm.xlu0 %38, %v29
    %v40 = vpop.permute.xlu0 %39
    %43 = vset.pattern.permute.xlu0 0
    %44 = vperm.xlu0 %43, %v30
    %v45 = vpop.permute.xlu0 %44
    %48 = vset.pattern.permute.xlu0 0
    %49 = vperm.xlu0 %48, %v31
    %v50 = vpop.permute.xlu0 %49
    %v56 = vunpack.c.l.b16 %v22
    %v57 = vunpack.c.l.b16 %v23
    %v58 = vunpack.c.l.b16 %v24
    %v59 = vunpack.c.l.b16 %v25
    %v60 = vpack.c.b16 %v57, %v56
    %v61 = vpack.c.b16 %v59, %v58
    %v64 = vunpack.c.l.b16 %v26
    %v65 = vunpack.c.l.b16 %v27
    %v66 = vpack.c.b16 %v65, %v64
    %vm68 = vcmask 130048
    %v70 = vsel %vm68, %v60, 0
    %v73 = vsel %vm68, %v61, 0
    %75 = vmatprep.subr.bf16.mxu0 0
    %76 = vmatpush1.bf16.msra.mxu0 %v66
    %77 = vmatprep.subr.bf16.mxu0 0
    %78 = vmatpush1.bf16.msra.mxu0 0
    %79 = vmatprep.subr.bf16.mxu0 0
    %80 = vmatpush1.bf16.msra.mxu0 0
    %81 = vmatprep.subr.bf16.mxu0 0
    %82 = vmatpush1.bf16.msra.mxu0 0
    %83 = vmatprep.subr.bf16.mxu0 0
    %84 = vmatpush1.bf16.msra.mxu0 0
    %85 = vmatprep.subr.bf16.mxu0 0
    %86 = vmatpush1.bf16.msra.mxu0 0
    %87 = vmatprep.subr.bf16.mxu0 0
    %88 = vmatpush1.bf16.msra.mxu0 0
    %89 = vmatprep.subr.bf16.mxu0 0
    %90 = vmatpush1.bf16.msra.mxu0 0
    %91 = vmatprep.subr.bf16.mxu0 0
    %92 = vmatpush1.bf16.msra.mxu0 0
    %93 = vmatprep.subr.bf16.mxu0 0
    %94 = vmatpush1.bf16.msra.mxu0 0
    %95 = vmatprep.subr.bf16.mxu0 0
    %96 = vmatpush1.bf16.msra.mxu0 0
    %97 = vmatprep.subr.bf16.mxu0 0
    %98 = vmatpush1.bf16.msra.mxu0 0
    %99 = vmatprep.subr.bf16.mxu0 0
    %100 = vmatpush1.bf16.msra.mxu0 0
    %101 = vmatprep.subr.bf16.mxu0 0
    %102 = vmatpush1.bf16.msra.mxu0 0
    %103 = vmatprep.subr.bf16.mxu0 0
    %104 = vmatpush1.bf16.msra.mxu0 0
    %105 = vmatprep.subr.bf16.mxu0 0
    %106 = vmatpush1.bf16.msra.mxu0 0
    %107 = vmatprep.mubr.bf16.mxu0 0
    %108 = vmatmul.mubr.bf16.gmra.mrb[0].mxu0 %v70
    %v109 = vpop.f32.mrb[0].mxu0
    %v110 = vadd.f32 %v35, %v109
    %v111 = vpop.f32.mrb[0].mxu0
    %v112 = vpop.f32.mrb[0].mxu0
    %v113 = vadd.f32 %v40, %v112
    %v114 = vpop.f32.mrb[0].mxu0
    %115 = vmatprep.mubr.bf16.mxu0 0
    %116 = vmatmul.mubr.bf16.gmra.mrb[0].mxu0 %v73
    %v117 = vpop.f32.mrb[0].mxu0
    %v118 = vadd.f32 %v45, %v117
    %v119 = vpop.f32.mrb[0].mxu0
    %v120 = vpop.f32.mrb[0].mxu0
    %v121 = vadd.f32 %v50, %v120
    %v122 = vpop.f32.mrb[0].mxu0
    %123 = vdwg.mxu0
    %v124 = vmax.f32 %v110, 0.0
    %v125 = vmax.f32 %v113, 0.0
    %v126 = vmax.f32 %v118, 0.0
    %v127 = vmax.f32 %v121, 0.0
    %v128 = vld [vmem:[%s3] sm:$0xf]
    %v129 = vld [vmem:[%s3 + $0x4] sm:$0xf]
    %v130 = vpack.c.bf16 %v125, %v124
    %v131 = vpack.c.bf16 %v127, %v126
    %v132 = vld [vmem:[%s4] sm:$0xff]
    %v133 = vld [vmem:[%s4 + $0x8] sm:$0xff]
    %135 = vset.pattern.permute.xlu0 0
    %136 = vperm.xlu0 %135, %v132
    %v137 = vpop.permute.xlu0 %136
    %140 = vset.pattern.permute.xlu0 0
    %141 = vperm.xlu0 %140, %v133
    %v142 = vpop.permute.xlu0 %141
    %v146 = vunpack.c.l.b16 %v128
    %v147 = vunpack.c.l.b16 %v129
    %v148 = vpack.c.b16 %v147, %v146
    %vm149 = vcmask 261120
    %v151 = vsel %vm149, %v148, 0
    %153 = vmatprep.subr.bf16.mxu0 0
    %154 = vmatpush1.bf16.msra.mxu0 %v130
    %155 = vmatprep.subr.bf16.mxu0 0
    %156 = vmatpush1.bf16.msra.mxu0 %v131
    %157 = vmatprep.subr.bf16.mxu0 0
    %158 = vmatpush1.bf16.msra.mxu0 0
    %159 = vmatprep.subr.bf16.mxu0 0
    %160 = vmatpush1.bf16.msra.mxu0 0
    %161 = vmatprep.subr.bf16.mxu0 0
    %162 = vmatpush1.bf16.msra.mxu0 0
    %163 = vmatprep.subr.bf16.mxu0 0
    %164 = vmatpush1.bf16.msra.mxu0 0
    %165 = vmatprep.subr.bf16.mxu0 0
    %166 = vmatpush1.bf16.msra.mxu0 0
    %167 = vmatprep.subr.bf16.mxu0 0
    %168 = vmatpush1.bf16.msra.mxu0 0
    %169 = vmatprep.subr.bf16.mxu0 0
    %170 = vmatpush1.bf16.msra.mxu0 0
    %171 = vmatprep.subr.bf16.mxu0 0
    %172 = vmatpush1.bf16.msra.mxu0 0
    %173 = vmatprep.subr.bf16.mxu0 0
    %174 = vmatpush1.bf16.msra.mxu0 0
    %175 = vmatprep.subr.bf16.mxu0 0
    %176 = vmatpush1.bf16.msra.mxu0 0
    %177 = vmatprep.subr.bf16.mxu0 0
    %178 = vmatpush1.bf16.msra.mxu0 0
    %179 = vmatprep.subr.bf16.mxu0 0
    %180 = vmatpush1.bf16.msra.mxu0 0
    %181 = vmatprep.subr.bf16.mxu0 0
    %182 = vmatpush1.bf16.msra.mxu0 0
    %183 = vmatprep.subr.bf16.mxu0 0
    %184 = vmatpush1.bf16.msra.mxu0 0
    %185 = vmatprep.mubr.bf16.mxu0 0
    %186 = vmatmul.mubr.bf16.gmra.mrb[0].mxu0 %v151
    %v187 = vpop.f32.mrb[0].mxu0
    %v188 = vadd.f32 %v137, %v187
    %v189 = vpop.f32.mrb[0].mxu0
    %v190 = vpop.f32.mrb[0].mxu0
    %v191 = vadd.f32 %v142, %v190
    %v192 = vpop.f32.mrb[0].mxu0
    %193 = vdwg.mxu0
    %v194 = vmax.f32 %v188, 0.0
    %v195 = vmax.f32 %v191, 0.0
    %196 = vst [vmem:[#allocation2] sm:$0xff] %v194
    %197 = vst [vmem:[#allocation2 + $0x8] sm:$0xff] %v195
    // Predicated region
    $region22: #{tpu_custom_call.1} parent=1 // pred_check
      _
    $region23: #{tpu_custom_call.1} parent=1 // pred_check_branch
      %199 = sbr.rel (0) target = $region25
    $region24: #{tpu_custom_call.1} parent=1 // pred_region
      %s201 = ssub.s32 256, 256
      %202 = vsyncadd [#allocation3], %s201
      %s203 = sshll.u32 [#allocation2], 4
      %s204 = int_to_ptr.vmem [resolvable:$true] %s203
      %209 = dma.vmem_to_hbm [thread:$0]  %s204, 256, %s5, [#allocation3], 128, 128, 8
    $region25: #{tpu_custom_call.1} parent=1 // pred_fallthru
      _
    // Predicated region
    $region26: #{tpu_custom_call.1} parent=1 // pred_check
      _
    $region27: #{tpu_custom_call.1} parent=1 // pred_check_branch
      %211 = sbr.rel (0) target = $region29
    $region28: #{tpu_custom_call.1} parent=1 // pred_region
      %212 = dma.done [#allocation3], 256
    $region29: #{tpu_custom_call.1} parent=1 // pred_fallthru
      _
    %213 = vsyncpa [#allocation3], 1

</llo_original>
